<compile_context>
chip_gen: v5e
topology: v5e:2x2
jax: 0.10.0
libtpu: 0.0.40
codegen_flags: <defaults>
</compile_context>

<pallas_src>
import functools

import jax
import jax.numpy as jnp
from jax import lax
from jax.experimental import pallas as pl
from jax.experimental.pallas import tpu as pltpu


def _round_up(x, m):
    return ((x + m - 1) // m) * m


def _proto_dist_kernel(x_ref, p_ref, psq_ref, o_ref, *, use_bf16_matmul):
    """One (batch-tile, class-tile) block of the prototype logits.

    x_ref   : [bn, Dp]  block of input features (VMEM)
    p_ref   : [bc, Dp]  block of prototypes (VMEM)
    psq_ref : [1,  bc]  precomputed ||p_j||^2 for this class tile (VMEM)
    o_ref   : [bn, bc]  output logits block
    """
    x = x_ref[...].astype(jnp.float32)            # [bn, Dp]
    p = p_ref[...].astype(jnp.float32)            # [bc, Dp]

    # ||x_i||^2 on the VPU (f32); ||p_j||^2 was hoisted to the wrapper.
    x_sq = jnp.sum(x * x, axis=-1, keepdims=True)  # [bn, 1]
    p_sq = psq_ref[...]                            # [1,  bc]

    # Cross term on the MXU: contract on D directly (no explicit transpose).
    if use_bf16_matmul:
        xm = x.astype(jnp.bfloat16)
        pm = p.astype(jnp.bfloat16)
    else:
        xm, pm = x, p
    xp = lax.dot_general(
        xm, pm,
        dimension_numbers=(((1,), (1,)), ((), ())),
        preferred_element_type=jnp.float32,
    )                                              # [bn, bc]

    # Fused negation: -(x_sq - 2*xp + p_sq) = 2*xp - x_sq - p_sq
    o_ref[...] = (2.0 * xp - x_sq - p_sq).astype(o_ref.dtype)


def prototype_classifier_forward(x, prototypes, *, block_n=256, block_c=256,
                                 use_bf16_matmul=True):
    """Pallas wrapper: returns -||x_i - p_j||^2 logits of shape [N, C]."""
    N, D = x.shape
    C, D2 = prototypes.shape
    assert D == D2

    # --- host-side padding / tile sizing ---------------------------------
    Dp = _round_up(max(D, 128), 128)                 # lane axis: multiple of 128
    bn = min(block_n, _round_up(N, 8))               # sublane axis: multiple of 8
    bc = min(block_c, _round_up(C, 128))             # lane-dense output tiles
    Np = _round_up(N, bn)
    Cp = _round_up(C, bc)

    x_p = jnp.pad(x.astype(jnp.float32), ((0, Np - N), (0, Dp - D)))
    proto_p = jnp.pad(prototypes.astype(jnp.float32), ((0, Cp - C), (0, Dp - D)))

    # Hoist ||p_j||^2 out of the kernel: computed once here (tiny XLA op).
    p_sq = jnp.sum(proto_p * proto_p, axis=-1, keepdims=True).T   # [1, Cp]

    grid = (Np // bn, Cp // bc)

    kernel = functools.partial(_proto_dist_kernel,
                               use_bf16_matmul=use_bf16_matmul)

    out = pl.pallas_call(
        kernel,
        out_shape=jax.ShapeDtypeStruct((Np, Cp), jnp.float32),
        grid_spec=pltpu.PrefetchScalarGridSpec(
            num_scalar_prefetch=0,
            grid=grid,
            in_specs=[
                # x: tile over batch, full (padded) feature dim.
                pl.BlockSpec((bn, Dp), lambda i, j: (i, 0)),
                # prototypes: tile over classes, full (padded) feature dim.
                pl.BlockSpec((bc, Dp), lambda i, j: (j, 0)),
                # precomputed ||p||^2, tiled over classes.
                pl.BlockSpec((1, bc), lambda i, j: (0, j)),
            ],
            out_specs=pl.BlockSpec((bn, bc), lambda i, j: (i, j)),
        ),
        compiler_params=pltpu.CompilerParams(
            dimension_semantics=("parallel", "parallel"),
        ),
    )(x_p, proto_p, p_sq)

    return out[:N, :C]


def _reference(x, prototypes):
    # pure-JAX reference: -pairwise squared Euclidean distance
    diff = x[:, None, :] - prototypes[None, :, :]
    return -jnp.sum(diff * diff, axis=-1)


if __name__ == "__main__":
    # Small shapes consistent with the module: feat_dim=32, num_classes=10,
    # batch=16.
    feat_dim = 32
    num_classes = 10
    batch = 16

    key = jax.random.PRNGKey(0)
    k_x, k_p = jax.random.split(key)

    # Deterministic parameter init mimicking kaiming_normal_ on a
    # (num_classes, feat_dim) weight: std = sqrt(2 / fan_in) = sqrt(2 / feat_dim).
    proto_std = jnp.sqrt(2.0 / feat_dim)
    prototypes = proto_std * jax.random.normal(
        k_p, (num_classes, feat_dim), dtype=jnp.float32
    )

    x = jax.random.normal(k_x, (batch, feat_dim), dtype=jnp.float32)

    ref = _reference(x, prototypes)

    # Default (perf) path: bf16 MXU cross term, f32 norms / accumulation.
    out = prototype_classifier_forward(x, prototypes)
    out = jax.block_until_ready(out)
    assert out.shape == (batch, num_classes)
    assert jnp.allclose(out, ref, atol=1e-1, rtol=1e-2)

    # Full-f32 path: tight tolerance against the reference.
    out_f32 = prototype_classifier_forward(x, prototypes, use_bf16_matmul=False)
    out_f32 = jax.block_until_ready(out_f32)
    assert jnp.allclose(out_f32, ref, atol=1e-4, rtol=1e-4)

    print("KERNEL_OK")
</pallas_src>

<mosaic_0001>
module attributes {stable_mosaic.version = 11 : i64} {
  func.func @_proto_dist_kernel(%arg0: i32, %arg1: i32, %arg2: memref<16x128xf32, #tpu.memory_space<vmem>>, %arg3: memref<128x128xf32, #tpu.memory_space<vmem>>, %arg4: memref<1x128xf32, #tpu.memory_space<vmem>>, %arg5: memref<16x128xf32, #tpu.memory_space<vmem>>) attributes {dimension_semantics = [#tpu.dimension_semantics<parallel>, #tpu.dimension_semantics<parallel>], iteration_bounds = array<i64: 1, 1>, scalar_prefetch = 0 : i64, scratch_operands = 0 : i64, tpu.core_type = #tpu.core_type<tc>, window_params = [{transform_indices = @transform_0, window_bounds = array<i64: 16, 128>}, {transform_indices = @transform_1, window_bounds = array<i64: 128, 128>}, {transform_indices = @transform_2, window_bounds = array<i64: 1, 128>}, {transform_indices = @transform_3, window_bounds = array<i64: 16, 128>}]} {
    %c0 = arith.constant 0 : index
    %c0_0 = arith.constant 0 : index
    %0 = vector.load %arg2[%c0, %c0_0] : memref<16x128xf32, #tpu.memory_space<vmem>>, vector<16x128xf32>
    %c0_1 = arith.constant 0 : index
    %c0_2 = arith.constant 0 : index
    %1 = vector.load %arg3[%c0_1, %c0_2] : memref<128x128xf32, #tpu.memory_space<vmem>>, vector<128x128xf32>
    %2 = arith.mulf %0, %0 : vector<16x128xf32>
    %cst = arith.constant dense<0.000000e+00> : vector<16xf32>
    %3 = vector.multi_reduction <add>, %2, %cst [1] : vector<16x128xf32> to vector<16xf32>
    %4 = vector.shape_cast %3 : vector<16xf32> to vector<16x1xf32>
    %c0_3 = arith.constant 0 : index
    %c0_4 = arith.constant 0 : index
    %5 = vector.load %arg4[%c0_3, %c0_4] : memref<1x128xf32, #tpu.memory_space<vmem>>, vector<1x128xf32>
    %6 = arith.truncf %0 : vector<16x128xf32> to vector<16x128xbf16>
    %7 = arith.truncf %1 : vector<128x128xf32> to vector<128x128xbf16>
    %cst_5 = arith.constant dense<0.000000e+00> : vector<16x128xf32>
    %8 = tpu.matmul %6, %7, %cst_5 {dimension_numbers = #tpu.dot_dimension_numbers<[1], [1], [0], [0], [0, 0, 1, 0], [], []>} : vector<16x128xbf16>, vector<128x128xbf16>, vector<16x128xf32> -> vector<16x128xf32>
    %cst_6 = arith.constant 2.000000e+00 : f32
    %9 = vector.broadcast %cst_6 : f32 to vector<16x128xf32>
    %10 = arith.mulf %9, %8 : vector<16x128xf32>
    %11 = vector.broadcast %4 : vector<16x1xf32> to vector<16x128xf32>
    %12 = arith.subf %10, %11 : vector<16x128xf32>
    %13 = vector.broadcast %5 : vector<1x128xf32> to vector<16x128xf32>
    %14 = arith.subf %12, %13 : vector<16x128xf32>
    %c0_7 = arith.constant 0 : index
    %c0_8 = arith.constant 0 : index
    %15 = vector.load %arg5[%c0_7, %c0_8] : memref<16x128xf32, #tpu.memory_space<vmem>>, vector<16x128xf32>
    tpu.vector_store %arg5[%c0_7, %c0_8], %14 {strides = array<i32>} : memref<16x128xf32, #tpu.memory_space<vmem>>, vector<16x128xf32>,
    return
  }
  func.func @transform_0(%arg0: i32, %arg1: i32) -> (i32, i32) {
    %c0_i32 = arith.constant 0 : i32
    %c0_i32_0 = arith.constant 0 : i32
    return %arg0, %c0_i32 : i32, i32
  }
  func.func @transform_1(%arg0: i32, %arg1: i32) -> (i32, i32) {
    %c0_i32 = arith.constant 0 : i32
    %c0_i32_0 = arith.constant 0 : i32
    return %arg1, %c0_i32 : i32, i32
  }
  func.func @transform_2(%arg0: i32, %arg1: i32) -> (i32, i32) {
    %c0_i32 = arith.constant 0 : i32
    %c0_i32_0 = arith.constant 0 : i32
    return %c0_i32, %arg1 : i32, i32
  }
  func.func @transform_3(%arg0: i32, %arg1: i32) -> (i32, i32) {
    %c0_i32 = arith.constant 0 : i32
    return %arg0, %arg1 : i32, i32
  }
}

</mosaic_0001>

<llo_original>
// kernel: tpu_custom_call.1
$region0: #{tpu_custom_call.1}
  #allocation0 [shape = 'u32[]', space=smem, size = 0x4, offset = 0x4, fixed_abs, tag = 'smem constant byte address 0x4 - core index']
  #allocation1 [shape = 'u32[72,128]{1,0:T(1,128)}', space=vmem, size = 0x9000, scoped, tag = 'internal scratch']
  %s0 = inlined_call_operand.hbm [shape: f32[16,128], index: 0, kind: input, shape index: {}]
  %s1 = inlined_call_operand.hbm [shape: f32[128,128], index: 1, kind: input, shape index: {}]
  %s2 = inlined_call_operand.vmem [shape: f32[1,128], index: 2, kind: input, shape index: {}]
  %s3 = inlined_call_operand.hbm [shape: f32[16,128], index: 3, kind: output, shape index: {}]
  %s4 = sld [smem:[#allocation0]]
  $region30: #{tpu_custom_call.1} parent=0
    _
  %s6 = ssub.s32 1, %s4
  %s7 = scalar_select 0, %s6, %s4
  $region1: #{tpu_custom_call.1} parent=0
    #allocation2 [shape = 'u8[8192]{0}', space=vmem, size = 0x2000, scoped, tag = 'input window, operand 0, single buffered']
    #allocation3 [shape = 's32[1]{0}', space=sflag, size = 0x4, scoped, tag = 'scoped memory for tpu_custom_call.1']
    #allocation4 [shape = 's32[1]{0}', space=sflag, size = 0x4, scoped, tag = 'scoped memory for tpu_custom_call.1']
    #allocation5 [shape = 'u8[65536]{0}', space=vmem, size = 0x10000, scoped, tag = 'input window, operand 1, single buffered']
    #allocation6 [shape = 's32[1]{0}', space=sflag, size = 0x4, scoped, tag = 'scoped memory for tpu_custom_call.1']
    #allocation7 [shape = 'u8[8192]{0}', space=vmem, size = 0x2000, scoped, tag = 'output window, operand 0, single buffered']
    %8 = vsyncpa [#allocation3], 0
    %9 = vsyncpa [#allocation6], 0
    %10 = vsyncpa [#allocation4], 0
    // Predicated region
    $region2: #{tpu_custom_call.1} parent=1 // pred_check
      _
    $region3: #{tpu_custom_call.1} parent=1 // pred_check_branch
      %12 = sbr.rel (0) target = $region5
    $region4: #{tpu_custom_call.1} parent=1 // pred_region
      %14 = vsyncadd [#allocation3], 0
      %s15 = sshll.u32 %s0, 4
      %s16 = int_to_ptr.hbm [resolvable:$true] %s15
      %s17 = sshll.u32 [#allocation2], 4
      %s18 = int_to_ptr.vmem [resolvable:$true] %s17
      %23 = dma.hbm_to_vmem [thread:$0]  %s16, 256, %s18, [#allocation3], 128, 128, 8
    $region5: #{tpu_custom_call.1} parent=1 // pred_fallthru
      _
    // Predicated region
    $region6: #{tpu_custom_call.1} parent=1 // pred_check
      _
    $region7: #{tpu_custom_call.1} parent=1 // pred_check_branch
      %25 = sbr.rel (0) target = $region9
    $region8: #{tpu_custom_call.1} parent=1 // pred_region
      %27 = vsyncadd [#allocation6], 0
      %s28 = sshll.u32 %s1, 4
      %s29 = int_to_ptr.hbm [resolvable:$true] %s28
      %s30 = sshll.u32 [#allocation5], 4
      %s31 = int_to_ptr.vmem [resolvable:$true] %s30
      %36 = dma.hbm_to_vmem [thread:$0]  %s29, 2048, %s31, [#allocation6], 128, 128, 8
    $region9: #{tpu_custom_call.1} parent=1 // pred_fallthru
      _
    // Predicated region
    $region10: #{tpu_custom_call.1} parent=1 // pred_check
      _
    $region11: #{tpu_custom_call.1} parent=1 // pred_check_branch
      %38 = sbr.rel (0) target = $region13
    $region12: #{tpu_custom_call.1} parent=1 // pred_region
      _
    $region13: #{tpu_custom_call.1} parent=1 // pred_fallthru
      _
    // Predicated region
    $region14: #{tpu_custom_call.1} parent=1 // pred_check
      _
    $region15: #{tpu_custom_call.1} parent=1 // pred_check_branch
      %40 = sbr.rel (0) target = $region17
    $region16: #{tpu_custom_call.1} parent=1 // pred_region
      %42 = dma.done [#allocation3], 256
    $region17: #{tpu_custom_call.1} parent=1 // pred_fallthru
      _
    // Predicated region
    $region18: #{tpu_custom_call.1} parent=1 // pred_check
      _
    $region19: #{tpu_custom_call.1} parent=1 // pred_check_branch
      %44 = sbr.rel (0) target = $region21
    $region20: #{tpu_custom_call.1} parent=1 // pred_region
      %46 = dma.done [#allocation6], 2048
    $region21: #{tpu_custom_call.1} parent=1 // pred_fallthru
      _
    %v47 = vld [vmem:[#allocation2] sm:$0xff]
    %v48 = vld [vmem:[#allocation2 + $0x8] sm:$0xff]
    %v49 = vld [vmem:[#allocation5] sm:$0xff]
    %v50 = vld [vmem:[#allocation5 + $0x8] sm:$0xff]
    %v51 = vld [vmem:[#allocation5 + $0x10] sm:$0xff]
    %v52 = vld [vmem:[#allocation5 + $0x18] sm:$0xff]
    %v53 = vld [vmem:[#allocation5 + $0x20] sm:$0xff]
    %v54 = vld [vmem:[#allocation5 + $0x28] sm:$0xff]
    %v55 = vld [vmem:[#allocation5 + $0x30] sm:$0xff]
    %v56 = vld [vmem:[#allocation5 + $0x38] sm:$0xff]
    %v57 = vld [vmem:[#allocation5 + $0x40] sm:$0xff]
    %v58 = vld [vmem:[#allocation5 + $0x48] sm:$0xff]
    %v59 = vld [vmem:[#allocation5 + $0x50] sm:$0xff]
    %v60 = vld [vmem:[#allocation5 + $0x58] sm:$0xff]
    %v61 = vld [vmem:[#allocation5 + $0x60] sm:$0xff]
    %v62 = vld [vmem:[#allocation5 + $0x68] sm:$0xff]
    %v63 = vld [vmem:[#allocation5 + $0x70] sm:$0xff]
    %v64 = vld [vmem:[#allocation5 + $0x78] sm:$0xff]
    %v65 = vmul.f32 %v47, %v47
    %v66 = vmul.f32 %v48, %v48
    %67 = vadd.xlane.f32.xlu0 %v65
    %v68 = vpop.xlane.xlu0 %67
    %69 = vadd.xlane.f32.xlu0 %v66
    %v70 = vpop.xlane.xlu0 %69
    %v71 = vld [vmem:[%s2] sm:$0x1]
    %v72 = vpack.c.bf16 %v48, %v47
    %v73 = vpack.c.bf16 %v50, %v49
    %v74 = vpack.c.bf16 %v52, %v51
    %v75 = vpack.c.bf16 %v54, %v53
    %v76 = vpack.c.bf16 %v56, %v55
    %v77 = vpack.c.bf16 %v58, %v57
    %v78 = vpack.c.bf16 %v60, %v59
    %v79 = vpack.c.bf16 %v62, %v61
    %v80 = vpack.c.bf16 %v64, %v63
    %81 = vmatpush.bf16.xpose.msra.mxu0 %v80
    %82 = vmatpush.bf16.xpose.msra.mxu0 %v79
    %83 = vmatpush.bf16.xpose.msra.mxu0 %v78
    %84 = vmatpush.bf16.xpose.msra.mxu0 %v77
    %85 = vmatpush.bf16.xpose.msra.mxu0 %v76
    %86 = vmatpush.bf16.xpose.msra.mxu0 %v75
    %87 = vmatpush.bf16.xpose.msra.mxu0 %v74
    %88 = vmatpush.bf16.xpose.msra.mxu0 %v73
    %89 = vmatmul.bf16.gmra.mxu0 %v72
    %v90 = vpop.f32.mrf.mxu0
    %v91 = vadd.f32 0.0, %v90
    %v92 = vpop.f32.mrf.mxu0
    %v93 = vadd.f32 0.0, %v92
    %94 = vdwg.mxu0
    %v95 = vmul.f32 %v91, 2.0
    %v96 = vmul.f32 %v93, 2.0
    %v97 = vsub.f32 %v95, %v68
    %v98 = vsub.f32 %v96, %v70
    %v100 = vperm.slane %v71, 0
    %v102 = vsub.f32 %v97, %v100
    %v103 = vsub.f32 %v98, %v100
    %104 = vst [vmem:[#allocation7] sm:$0xff] %v102
    %105 = vst [vmem:[#allocation7 + $0x8] sm:$0xff] %v103
    // Predicated region
    $region22: #{tpu_custom_call.1} parent=1 // pred_check
      _
    $region23: #{tpu_custom_call.1} parent=1 // pred_check_branch
      %107 = sbr.rel (0) target = $region25
    $region24: #{tpu_custom_call.1} parent=1 // pred_region
      %109 = vsyncadd [#allocation4], 0
      %s110 = sshll.u32 [#allocation7], 4
      %s111 = int_to_ptr.vmem [resolvable:$true] %s110
      %s112 = sshll.u32 %s3, 4
      %s113 = int_to_ptr.hbm [resolvable:$true] %s112
      %118 = dma.vmem_to_hbm [thread:$0]  %s111, 256, %s113, [#allocation4], 128, 128, 8
    $region25: #{tpu_custom_call.1} parent=1 // pred_fallthru
      _
    // Predicated region
    $region26: #{tpu_custom_call.1} parent=1 // pred_check
      _
    $region27: #{tpu_custom_call.1} parent=1 // pred_check_branch
      %120 = sbr.rel (0) target = $region29
    $region28: #{tpu_custom_call.1} parent=1 // pred_region
      %122 = dma.done [#allocation4], 256
    $region29: #{tpu_custom_call.1} parent=1 // pred_fallthru
      _
    %123 = vsyncpa [#allocation3], 1
    %124 = vsyncpa [#allocation6], 1
    %125 = vsyncpa [#allocation4], 1

</llo_original>
